<compile_context>
chip_gen: v7x
topology: tpu7x:2x2x1
jax: 0.10.0
libtpu: 0.0.40
codegen_flags: <defaults>
</compile_context>

<pallas_src>
import jax
import jax.numpy as jnp
from jax import lax
from jax.experimental import pallas as pl
from jax.experimental.pallas import tpu as pltpu

C_IN = 3            # BN channels == conv1 kernel height
L_IN = 164          # sequence length (forced by reshape(1, -1, 164))
C1 = 8              # conv1 out channels
K2 = 10             # conv2 kernel size == stride
C2 = 40             # conv2 out channels
T2 = (L_IN - K2) // K2 + 1   # 16 conv2 output positions
POOL = 8
C3 = C2 // POOL     # 5 pooled rows
FEAT = C3 * T2      # 80
CLS = 3
BN_EPS = 1e-5

GROUP = 8                   # sublane-aligned row group per tap k in the slab
KCON = K2 * GROUP           # 80: padded contraction length of the fused conv
OUT_L = 128                 # lane-dense output width

# Packed parameter-slab row offsets (all 8-aligned).
OFF_WBIG = 0                # (40, 80)  fused BN-affine+conv1+conv2 weight
OFF_B2 = 40                 # (40, 1)   fused conv bias
OFF_W3 = 80                 # (5, 48)   Linear weight, [j, c*16+t] layout
OFF_BG = 88                 # (48, 128) 0/1 block-sum matrix for the tail
OFF_B3 = 136                # (1, 128)  Linear bias (lane-padded)
PSLAB_ROWS = 144


def bigru_kernel(x_ref, sel_ref, p_ref, out_ref, slab_ref):
    x = x_ref[...]                                           # (3, 164) f32

    # --- BatchNorm1d(3): batch statistics (train-mode). gamma/beta are folded
    #     into the conv weights in the wrapper, so only normalization is done.
    mean = jnp.mean(x, axis=1, keepdims=True)                # (3, 1)
    xc = x - mean
    var = jnp.mean(xc * xc, axis=1, keepdims=True)           # (3, 1) biased
    xn = xc * lax.rsqrt(var + BN_EPS)                        # (3, 164)

    # --- im2col unfold of the stride-10 windows: one MXU push against the
    #     constant 0/1 selection matrix SelAll[l, k*16+t] = [l == t*10+k].
    x_unf = jnp.dot(xn, sel_ref[...],
                    preferred_element_type=jnp.float32)      # (3, 160)

    # --- Scatter the 10 k-slices into an 8-row-aligned (80, 16) slab so the
    #     fused BN-affine + conv1 + conv2 becomes ONE (40,80)@(80,16) matmul.
    #     Rows k*8+3 .. k*8+7 stay zero and multiply zero weight columns.
    slab_ref[...] = jnp.zeros((KCON, T2), dtype=jnp.float32)
    for k in range(K2):                                      # unrolled, 10 steps
        slab_ref[k * GROUP:k * GROUP + C_IN, :] = x_unf[:, k * T2:(k + 1) * T2]

    wbig = p_ref[OFF_WBIG:OFF_WBIG + C2, 0:KCON]             # (40, 80)
    b2c = p_ref[OFF_B2:OFF_B2 + C2, 0:1]                     # (40, 1)
    out2 = jnp.dot(wbig, slab_ref[...],
                   preferred_element_type=jnp.float32) + b2c  # (40, 16)

    # --- MaxPool2d((8,1)): grouped max over 8-row blocks -> (5, 16).
    pooled = jnp.max(jnp.reshape(out2, (C3, POOL, T2)), axis=1)

    # --- Linear(80, 3) fused tail: per-class weights applied elementwise on
    #     the pooled slab, row-sum, then one lane-dense matmul + bias.
    w3all = p_ref[OFF_W3:OFF_W3 + C3, 0:CLS * T2]            # (5, 48)
    p3 = jnp.concatenate([pooled] * CLS, axis=1)             # (5, 48)
    colsum = jnp.sum(p3 * w3all, axis=0, keepdims=True)      # (1, 48)
    blockg = p_ref[OFF_BG:OFF_BG + CLS * T2, :]              # (48, 128)
    b3row = p_ref[OFF_B3:OFF_B3 + 1, :]                      # (1, 128)
    out_ref[...] = jnp.dot(colsum, blockg,
                           preferred_element_type=jnp.float32) + b3row


def _build_constants(params):
    """Wrapper-side re-layout / folding (pure glue, no in-kernel cost)."""
    gamma, beta, w1, b1, w2, b2, w3, b3 = params

    # Fold BN affine into conv1, then conv1 into conv2.
    w1m = w1.reshape(C1, C_IN)                               # (8, 3)
    w1g = w1m * gamma[None, :]                               # gamma folded
    b1g = b1 + w1m @ beta                                    # beta folded
    a = jnp.einsum('cik,ij->cjk', w2, w1g)                   # (40, 3, 10)
    bias2 = b2 + jnp.einsum('cik,i->c', w2, b1g)             # (40,)
    a_kj = jnp.transpose(a, (0, 2, 1))                       # (40, 10, 3)
    wbig = jnp.pad(a_kj, ((0, 0), (0, 0), (0, GROUP - C_IN))).reshape(C2, KCON)

    # Constant 0/1 unfold selection: Sel[l, k*16+t] = 1 iff l == t*10 + k.
    l = jnp.arange(L_IN)[:, None]
    col = jnp.arange(K2 * T2)[None, :]
    sel = (l == (col % T2) * K2 + col // T2).astype(jnp.float32)   # (164, 160)

    # Linear(80,3) weights rearranged for the fused tail.
    w3all = jnp.transpose(w3.reshape(CLS, C3, T2), (1, 0, 2)).reshape(C3, CLS * T2)
    r = jnp.arange(CLS * T2)[:, None]
    c = jnp.arange(OUT_L)[None, :]
    blockg = (c == r // T2).astype(jnp.float32)              # (48, 128)
    b3row = jnp.zeros((1, OUT_L), jnp.float32).at[0, :CLS].set(b3)

    # Pack everything small into one VMEM slab (one DMA instead of seven).
    pslab = jnp.zeros((PSLAB_ROWS, OUT_L), jnp.float32)
    pslab = pslab.at[OFF_WBIG:OFF_WBIG + C2, 0:KCON].set(wbig)
    pslab = pslab.at[OFF_B2:OFF_B2 + C2, 0:1].set(bias2[:, None])
    pslab = pslab.at[OFF_W3:OFF_W3 + C3, 0:CLS * T2].set(w3all)
    pslab = pslab.at[OFF_BG:OFF_BG + CLS * T2, :].set(blockg)
    pslab = pslab.at[OFF_B3:OFF_B3 + 1, :].set(b3row)
    return sel, pslab


def bigru_forward(x, params):
    """x: (1, 3, 164) float32 -> logits (1, 3)."""
    sel, pslab = _build_constants(params)
    x2 = x[0]                                                # (3, 164)

    vmem = lambda: pl.BlockSpec(memory_space=pltpu.MemorySpace.VMEM)
    out = pl.pallas_call(
        bigru_kernel,
        out_shape=jax.ShapeDtypeStruct((1, OUT_L), jnp.float32),
        in_specs=[vmem(), vmem(), vmem()],
        out_specs=vmem(),
        scratch_shapes=[pltpu.VMEM((KCON, T2), jnp.float32)],
    )(x2, sel, pslab)
    return out[:, :CLS]


def bigru_reference(x, params):
    """Pure-JAX reference mirroring the PyTorch forward."""
    gamma, beta, w1, b1, w2, b2, w3, b3 = params
    xb = x[0]                                                        # (3, 164)
    mean = xb.mean(axis=1, keepdims=True)
    var = ((xb - mean) ** 2).mean(axis=1, keepdims=True)
    xn = (xb - mean) / jnp.sqrt(var + BN_EPS) * gamma[:, None] + beta[:, None]
    h = w1.reshape(C1, C_IN) @ xn + b1[:, None]                      # (8, 164)
    patches = jnp.stack([h[:, t * K2:t * K2 + K2] for t in range(T2)], axis=0)
    out2 = jnp.einsum('cik,tik->ct', w2, patches) + b2[:, None]      # (40, 16)
    pooled = out2.reshape(C3, POOL, T2).max(axis=1)                  # (5, 16)
    feat = pooled.reshape(1, FEAT)
    return feat @ w3.T + b3[None, :]


def init_params(key):
    ks = jax.random.split(key, 8)
    gamma = 1.0 + 0.1 * jax.random.normal(ks[0], (C_IN,), jnp.float32)
    beta = 0.1 * jax.random.normal(ks[1], (C_IN,), jnp.float32)
    w1 = 0.2 * jax.random.normal(ks[2], (C1, 1, C_IN, 1), jnp.float32)
    b1 = 0.1 * jax.random.normal(ks[3], (C1,), jnp.float32)
    w2 = 0.1 * jax.random.normal(ks[4], (C2, C1, K2), jnp.float32)
    b2 = 0.1 * jax.random.normal(ks[5], (C2,), jnp.float32)
    w3 = 0.1 * jax.random.normal(ks[6], (CLS, FEAT), jnp.float32)
    b3 = 0.1 * jax.random.normal(ks[7], (CLS,), jnp.float32)
    return (gamma, beta, w1, b1, w2, b2, w3, b3)


if __name__ == "__main__":
    key = jax.random.PRNGKey(0)
    k_x, k_p = jax.random.split(key)
    # Shape forced by the module: reshape(1, -1, 164) + Conv1d(8, ...) require
    # the input to be (1, 3, 164).
    x = jax.random.normal(k_x, (1, C_IN, L_IN), dtype=jnp.float32)
    params = init_params(k_p)

    logits = jax.block_until_ready(bigru_forward(x, params))
    ref = jax.block_until_ready(bigru_reference(x, params))

    assert logits.shape == (1, CLS), logits.shape
    if not jnp.allclose(logits, ref, rtol=1e-3, atol=1e-3):
        raise AssertionError(f"mismatch: pallas={logits} ref={ref}")
    print("KERNEL_OK")
</pallas_src>

<mosaic_0001>
module attributes {stable_mosaic.version = 11 : i64} {
  func.func @bigru_kernel(%arg0: memref<3x164xf32, #tpu.memory_space<vmem>>, %arg1: memref<164x160xf32, #tpu.memory_space<vmem>>, %arg2: memref<144x128xf32, #tpu.memory_space<vmem>>, %arg3: memref<1x128xf32, #tpu.memory_space<vmem>>, %arg4: memref<80x16xf32, #tpu.memory_space<vmem>>) attributes {dimension_semantics = [], scalar_prefetch = 0 : i64, scratch_operands = 1 : i64, tpu.core_type = #tpu.core_type<tc>} {
    %c0 = arith.constant 0 : index
    %c0_0 = arith.constant 0 : index
    %0 = vector.load %arg0[%c0, %c0_0] : memref<3x164xf32, #tpu.memory_space<vmem>>, vector<3x164xf32>
    %cst = arith.constant dense<0.000000e+00> : vector<3xf32>
    %1 = vector.multi_reduction <add>, %0, %cst [1] : vector<3x164xf32> to vector<3xf32>
    %2 = vector.shape_cast %1 : vector<3xf32> to vector<3x1xf32>
    %cst_1 = arith.constant 1.640000e+02 : f32
    %3 = vector.broadcast %cst_1 : f32 to vector<3x1xf32>
    %4 = arith.divf %2, %3 : vector<3x1xf32>
    %5 = vector.broadcast %4 : vector<3x1xf32> to vector<3x164xf32>
    %6 = arith.subf %0, %5 : vector<3x164xf32>
    %7 = arith.mulf %6, %6 : vector<3x164xf32>
    %cst_2 = arith.constant dense<0.000000e+00> : vector<3xf32>
    %8 = vector.multi_reduction <add>, %7, %cst_2 [1] : vector<3x164xf32> to vector<3xf32>
    %9 = vector.shape_cast %8 : vector<3xf32> to vector<3x1xf32>
    %cst_3 = arith.constant 1.640000e+02 : f32
    %10 = vector.broadcast %cst_3 : f32 to vector<3x1xf32>
    %11 = arith.divf %9, %10 : vector<3x1xf32>
    %cst_4 = arith.constant 9.99999974E-6 : f32
    %12 = vector.broadcast %cst_4 : f32 to vector<3x1xf32>
    %13 = arith.addf %11, %12 : vector<3x1xf32>
    %14 = math.rsqrt %13 : vector<3x1xf32>
    %15 = vector.broadcast %14 : vector<3x1xf32> to vector<3x164xf32>
    %16 = arith.mulf %6, %15 : vector<3x164xf32>
    %c0_5 = arith.constant 0 : index
    %c0_6 = arith.constant 0 : index
    %17 = vector.load %arg1[%c0_5, %c0_6] : memref<164x160xf32, #tpu.memory_space<vmem>>, vector<164x160xf32>
    %cst_7 = arith.constant dense<0.000000e+00> : vector<3x160xf32>
    %18 = tpu.matmul %16, %17, %cst_7 {dimension_numbers = #tpu.dot_dimension_numbers<[1], [0], [0], [1], [0, 0, 1, 1], [], []>} : vector<3x164xf32>, vector<164x160xf32>, vector<3x160xf32> -> vector<3x160xf32>
    %cst_8 = arith.constant 0.000000e+00 : f32
    %19 = vector.broadcast %cst_8 : f32 to vector<80x16xf32>
    %c0_9 = arith.constant 0 : index
    %c0_10 = arith.constant 0 : index
    %20 = vector.load %arg4[%c0_9, %c0_10] : memref<80x16xf32, #tpu.memory_space<vmem>>, vector<80x16xf32>
    tpu.vector_store %arg4[%c0_9, %c0_10], %19 {strides = array<i32>} : memref<80x16xf32, #tpu.memory_space<vmem>>, vector<80x16xf32>,
    %21 = vector.extract_strided_slice %18 {offsets = [0, 0], sizes = [3, 16], strides = [1, 1]} : vector<3x160xf32> to vector<3x16xf32>
    %c0_11 = arith.constant 0 : index
    %c0_12 = arith.constant 0 : index
    %22 = vector.load %arg4[%c0_11, %c0_12] : memref<80x16xf32, #tpu.memory_space<vmem>>, vector<3x16xf32>
    tpu.vector_store %arg4[%c0_11, %c0_12], %21 {strides = array<i32>} : memref<80x16xf32, #tpu.memory_space<vmem>>, vector<3x16xf32>,
    %23 = vector.extract_strided_slice %18 {offsets = [0, 16], sizes = [3, 16], strides = [1, 1]} : vector<3x160xf32> to vector<3x16xf32>
    %c8 = arith.constant 8 : index
    %c0_13 = arith.constant 0 : index
    %24 = vector.load %arg4[%c8, %c0_13] : memref<80x16xf32, #tpu.memory_space<vmem>>, vector<3x16xf32>
    tpu.vector_store %arg4[%c8, %c0_13], %23 {strides = array<i32>} : memref<80x16xf32, #tpu.memory_space<vmem>>, vector<3x16xf32>,
    %25 = vector.extract_strided_slice %18 {offsets = [0, 32], sizes = [3, 16], strides = [1, 1]} : vector<3x160xf32> to vector<3x16xf32>
    %c16 = arith.constant 16 : index
    %c0_14 = arith.constant 0 : index
    %26 = vector.load %arg4[%c16, %c0_14] : memref<80x16xf32, #tpu.memory_space<vmem>>, vector<3x16xf32>
    tpu.vector_store %arg4[%c16, %c0_14], %25 {strides = array<i32>} : memref<80x16xf32, #tpu.memory_space<vmem>>, vector<3x16xf32>,
    %27 = vector.extract_strided_slice %18 {offsets = [0, 48], sizes = [3, 16], strides = [1, 1]} : vector<3x160xf32> to vector<3x16xf32>
    %c24 = arith.constant 24 : index
    %c0_15 = arith.constant 0 : index
    %28 = vector.load %arg4[%c24, %c0_15] : memref<80x16xf32, #tpu.memory_space<vmem>>, vector<3x16xf32>
    tpu.vector_store %arg4[%c24, %c0_15], %27 {strides = array<i32>} : memref<80x16xf32, #tpu.memory_space<vmem>>, vector<3x16xf32>,
    %29 = vector.extract_strided_slice %18 {offsets = [0, 64], sizes = [3, 16], strides = [1, 1]} : vector<3x160xf32> to vector<3x16xf32>
    %c32 = arith.constant 32 : index
    %c0_16 = arith.constant 0 : index
    %30 = vector.load %arg4[%c32, %c0_16] : memref<80x16xf32, #tpu.memory_space<vmem>>, vector<3x16xf32>
    tpu.vector_store %arg4[%c32, %c0_16], %29 {strides = array<i32>} : memref<80x16xf32, #tpu.memory_space<vmem>>, vector<3x16xf32>,
    %31 = vector.extract_strided_slice %18 {offsets = [0, 80], sizes = [3, 16], strides = [1, 1]} : vector<3x160xf32> to vector<3x16xf32>
    %c40 = arith.constant 40 : index
    %c0_17 = arith.constant 0 : index
    %32 = vector.load %arg4[%c40, %c0_17] : memref<80x16xf32, #tpu.memory_space<vmem>>, vector<3x16xf32>
    tpu.vector_store %arg4[%c40, %c0_17], %31 {strides = array<i32>} : memref<80x16xf32, #tpu.memory_space<vmem>>, vector<3x16xf32>,
    %33 = vector.extract_strided_slice %18 {offsets = [0, 96], sizes = [3, 16], strides = [1, 1]} : vector<3x160xf32> to vector<3x16xf32>
    %c48 = arith.constant 48 : index
    %c0_18 = arith.constant 0 : index
    %34 = vector.load %arg4[%c48, %c0_18] : memref<80x16xf32, #tpu.memory_space<vmem>>, vector<3x16xf32>
    tpu.vector_store %arg4[%c48, %c0_18], %33 {strides = array<i32>} : memref<80x16xf32, #tpu.memory_space<vmem>>, vector<3x16xf32>,
    %35 = vector.extract_strided_slice %18 {offsets = [0, 112], sizes = [3, 16], strides = [1, 1]} : vector<3x160xf32> to vector<3x16xf32>
    %c56 = arith.constant 56 : index
    %c0_19 = arith.constant 0 : index
    %36 = vector.load %arg4[%c56, %c0_19] : memref<80x16xf32, #tpu.memory_space<vmem>>, vector<3x16xf32>
    tpu.vector_store %arg4[%c56, %c0_19], %35 {strides = array<i32>} : memref<80x16xf32, #tpu.memory_space<vmem>>, vector<3x16xf32>,
    %37 = vector.extract_strided_slice %18 {offsets = [0, 128], sizes = [3, 16], strides = [1, 1]} : vector<3x160xf32> to vector<3x16xf32>
    %c64 = arith.constant 64 : index
    %c0_20 = arith.constant 0 : index
    %38 = vector.load %arg4[%c64, %c0_20] : memref<80x16xf32, #tpu.memory_space<vmem>>, vector<3x16xf32>
    tpu.vector_store %arg4[%c64, %c0_20], %37 {strides = array<i32>} : memref<80x16xf32, #tpu.memory_space<vmem>>, vector<3x16xf32>,
    %39 = vector.extract_strided_slice %18 {offsets = [0, 144], sizes = [3, 16], strides = [1, 1]} : vector<3x160xf32> to vector<3x16xf32>
    %c72 = arith.constant 72 : index
    %c0_21 = arith.constant 0 : index
    %40 = vector.load %arg4[%c72, %c0_21] : memref<80x16xf32, #tpu.memory_space<vmem>>, vector<3x16xf32>
    tpu.vector_store %arg4[%c72, %c0_21], %39 {strides = array<i32>} : memref<80x16xf32, #tpu.memory_space<vmem>>, vector<3x16xf32>,
    %c0_22 = arith.constant 0 : index
    %c0_23 = arith.constant 0 : index
    %41 = vector.load %arg2[%c0_22, %c0_23] : memref<144x128xf32, #tpu.memory_space<vmem>>, vector<40x80xf32>
    %c40_24 = arith.constant 40 : index
    %c0_25 = arith.constant 0 : index
    %42 = vector.load %arg2[%c40_24, %c0_25] : memref<144x128xf32, #tpu.memory_space<vmem>>, vector<40x1xf32>
    %c0_26 = arith.constant 0 : index
    %c0_27 = arith.constant 0 : index
    %43 = vector.load %arg4[%c0_26, %c0_27] : memref<80x16xf32, #tpu.memory_space<vmem>>, vector<80x16xf32>
    %cst_28 = arith.constant dense<0.000000e+00> : vector<40x16xf32>
    %44 = tpu.matmul %41, %43, %cst_28 {dimension_numbers = #tpu.dot_dimension_numbers<[1], [0], [0], [1], [0, 0, 1, 1], [], []>} : vector<40x80xf32>, vector<80x16xf32>, vector<40x16xf32> -> vector<40x16xf32>
    %45 = vector.broadcast %42 : vector<40x1xf32> to vector<40x16xf32>
    %46 = arith.addf %44, %45 : vector<40x16xf32>
    %47 = vector.shape_cast %46 : vector<40x16xf32> to vector<5x8x16xf32>
    %cst_29 = arith.constant dense<0xFF800000> : vector<5x16xf32>
    %48 = vector.multi_reduction <maximumf>, %47, %cst_29 [1] : vector<5x8x16xf32> to vector<5x16xf32>
    %c80 = arith.constant 80 : index
    %c0_30 = arith.constant 0 : index
    %49 = vector.load %arg2[%c80, %c0_30] : memref<144x128xf32, #tpu.memory_space<vmem>>, vector<5x48xf32>
    %50 = tpu.concatenate %48, %48, %48 in 1 : vector<5x16xf32>, vector<5x16xf32>, vector<5x16xf32> -> vector<5x48xf32>
    %51 = arith.mulf %50, %49 : vector<5x48xf32>
    %cst_31 = arith.constant dense<0.000000e+00> : vector<48xf32>
    %52 = vector.multi_reduction <add>, %51, %cst_31 [0] : vector<5x48xf32> to vector<48xf32>
    %53 = vector.shape_cast %52 : vector<48xf32> to vector<1x48xf32>
    %c88 = arith.constant 88 : index
    %c0_32 = arith.constant 0 : index
    %54 = vector.load %arg2[%c88, %c0_32] : memref<144x128xf32, #tpu.memory_space<vmem>>, vector<48x128xf32>
    %c136 = arith.constant 136 : index
    %c0_33 = arith.constant 0 : index
    %55 = vector.load %arg2[%c136, %c0_33] : memref<144x128xf32, #tpu.memory_space<vmem>>, vector<1x128xf32>
    %cst_34 = arith.constant dense<0.000000e+00> : vector<1x128xf32>
    %56 = tpu.matmul %53, %54, %cst_34 {dimension_numbers = #tpu.dot_dimension_numbers<[1], [0], [0], [1], [0, 0, 1, 1], [], []>} : vector<1x48xf32>, vector<48x128xf32>, vector<1x128xf32> -> vector<1x128xf32>
    %57 = arith.addf %56, %55 : vector<1x128xf32>
    %c0_35 = arith.constant 0 : index
    %c0_36 = arith.constant 0 : index
    %58 = vector.load %arg3[%c0_35, %c0_36] : memref<1x128xf32, #tpu.memory_space<vmem>>, vector<1x128xf32>
    tpu.vector_store %arg3[%c0_35, %c0_36], %57 {strides = array<i32>} : memref<1x128xf32, #tpu.memory_space<vmem>>, vector<1x128xf32>,
    return
  }
}

</mosaic_0001>

<llo_original>
// kernel: tpu_custom_call.1
$region0: #{tpu_custom_call.1}
  #allocation0 [shape = 'u32[]', space=smem, size = 0x4, offset = 0x4, fixed_abs, tag = 'smem constant byte address 0x4 - core index']
  #allocation1 [shape = 'u32[144,128]{1,0:T(1,128)}', space=vmem, size = 0x12000, scoped, tag = 'internal scratch']
  #allocation2 [shape = 'f32[80,16]{1,0:T(8,128)}', space=vmem, size = 0xa000, scoped, tag = 'scratch operand']
  %s0 = inlined_call_operand.vmem [shape: f32[3,164], index: 0, kind: input, shape index: {}]
  %s1 = inlined_call_operand.vmem [shape: f32[164,160], index: 1, kind: input, shape index: {}]
  %s2 = inlined_call_operand.vmem [shape: f32[144,128], index: 2, kind: input, shape index: {}]
  %s3 = inlined_call_operand.hbm [shape: f32[1,128], index: 3, kind: output, shape index: {}]
  %s4 = sld [smem:[#allocation0]]
  $region22: #{tpu_custom_call.1} parent=0
    _
  %s6 = ssub.s32 1, %s4
  %s7 = scalar_select 0, %s6, %s4
  $region1: #{tpu_custom_call.1} parent=0
    #allocation3 [shape = 'u8[512]{0}', space=vmem, size = 0x400, scoped, tag = 'output window, operand 0, single buffered']
    #allocation4 [shape = 's32[1]{0}', space=sflag, size = 0x4, scoped, tag = 'scoped memory for tpu_custom_call.1']
    %8 = vsyncpa [#allocation4], 0
    // Predicated region
    $region2: #{tpu_custom_call.1} parent=1 // pred_check
      _
    $region3: #{tpu_custom_call.1} parent=1 // pred_check_branch
      %10 = sbr.rel (0) target = $region5
    $region4: #{tpu_custom_call.1} parent=1 // pred_region
      _
    $region5: #{tpu_custom_call.1} parent=1 // pred_fallthru
      _
    // Predicated region
    $region6: #{tpu_custom_call.1} parent=1 // pred_check
      _
    $region7: #{tpu_custom_call.1} parent=1 // pred_check_branch
      %12 = sbr.rel (0) target = $region9
    $region8: #{tpu_custom_call.1} parent=1 // pred_region
      _
    $region9: #{tpu_custom_call.1} parent=1 // pred_fallthru
      _
    // Predicated region
    $region10: #{tpu_custom_call.1} parent=1 // pred_check
      _
    $region11: #{tpu_custom_call.1} parent=1 // pred_check_branch
      %14 = sbr.rel (0) target = $region13
    $region12: #{tpu_custom_call.1} parent=1 // pred_region
      _
    $region13: #{tpu_custom_call.1} parent=1 // pred_fallthru
      _
    %v15 = vld [vmem:[%s0] sm:$0x77]
    %v17 = vcombine.high %v15, %v15
    %vm19 = vcmask 1042432
    %v20 = vsel %vm19, %v15, 0.0
    %vm21 = vcmask 288768
    %v22 = vsel %vm21, %v17, 0.0
    %v23 = vadd.f32 %v20, %v22
    %24 = vadd.xlane.f32.xlu0 %v23
    %v25 = vpop.xlane.xlu0 %24
    %v26 = vrcp.pop 164.0
    %v27 = vmul.f32 %v25, %v26
    %v30 = vunpack.c.l.s4 839922192
    %v31 = vunpack.c.0.s8 %v30
    %v32 = vlaneseq
    %v33 = vshrl.u32 %v32, 7
    %v34 = vsub.s32 %v31, %v33
    %v35 = vrot.slane %v27, %v34
    %v37 = vsub.f32 %v15, %v35
    %v38 = vmul.f32 %v37, %v37
    %v40 = vcombine.high %v38, %v38
    %v42 = vsel %vm19, %v38, 0.0
    %v43 = vsel %vm21, %v40, 0.0
    %v44 = vadd.f32 %v42, %v43
    %45 = vadd.xlane.f32.xlu0 %v44
    %v46 = vpop.xlane.xlu0 %45
    %v47 = vmul.f32 %v46, %v26
    %v48 = vadd.f32 %v47, 1e-05
    %v49 = vrsqrt.pop %v48
    %v52 = vunpack.c.l.s4 839922192
    %v53 = vunpack.c.0.s8 %v52
    %v54 = vlaneseq
    %v55 = vshrl.u32 %v54, 7
    %v56 = vsub.s32 %v53, %v55
    %v57 = vrot.slane %v49, %v56
    %v59 = vmul.f32 %v37, %v57
    %v60 = vld [vmem:[%s1] sm:$0xff]
    %v61 = vld [vmem:[%s1 + $0x8] sm:$0xff]
    %v62 = vld [vmem:[%s1 + $0x10] sm:$0xff]
    %v63 = vld [vmem:[%s1 + $0x18] sm:$0xff]
    %v64 = vld [vmem:[%s1 + $0x20] sm:$0xff]
    %v65 = vld [vmem:[%s1 + $0x28] sm:$0xff]
    %v66 = vld [vmem:[%s1 + $0x30] sm:$0xff]
    %v67 = vld [vmem:[%s1 + $0x38] sm:$0xff]
    %v68 = vld [vmem:[%s1 + $0x40] sm:$0xff]
    %v69 = vld [vmem:[%s1 + $0x48] sm:$0xff]
    %v70 = vld [vmem:[%s1 + $0x50] sm:$0xff]
    %v71 = vld [vmem:[%s1 + $0x58] sm:$0xff]
    %v72 = vld [vmem:[%s1 + $0x60] sm:$0xff]
    %v73 = vld [vmem:[%s1 + $0x68] sm:$0xff]
    %v74 = vld [vmem:[%s1 + $0x70] sm:$0xff]
    %v75 = vld [vmem:[%s1 + $0x78] sm:$0xff]
    %v76 = vld [vmem:[%s1 + $0x80] sm:$0xff]
    %v77 = vld [vmem:[%s1 + $0x88] sm:$0xff]
    %v78 = vld [vmem:[%s1 + $0x90] sm:$0xff]
    %v79 = vld [vmem:[%s1 + $0x98] sm:$0xff]
    %v80 = vld [vmem:[%s1 + $0xa0] sm:$0xff]
    %v81 = vld [vmem:[%s1 + $0xa8] sm:$0xff]
    %v82 = vld [vmem:[%s1 + $0xb0] sm:$0xff]
    %v83 = vld [vmem:[%s1 + $0xb8] sm:$0xff]
    %v84 = vld [vmem:[%s1 + $0xc0] sm:$0xff]
    %v85 = vld [vmem:[%s1 + $0xc8] sm:$0xff]
    %v86 = vld [vmem:[%s1 + $0xd0] sm:$0xff]
    %v87 = vld [vmem:[%s1 + $0xd8] sm:$0xff]
    %v88 = vld [vmem:[%s1 + $0xe0] sm:$0xff]
    %v89 = vld [vmem:[%s1 + $0xe8] sm:$0xff]
    %v90 = vld [vmem:[%s1 + $0xf0] sm:$0xff]
    %v91 = vld [vmem:[%s1 + $0xf8] sm:$0xff]
    %v92 = vld [vmem:[%s1 + $0x100] sm:$0xff]
    %v93 = vld [vmem:[%s1 + $0x108] sm:$0xff]
    %v94 = vld [vmem:[%s1 + $0x110] sm:$0xff]
    %v95 = vld [vmem:[%s1 + $0x118] sm:$0xff]
    %v96 = vld [vmem:[%s1 + $0x120] sm:$0xff]
    %v97 = vld [vmem:[%s1 + $0x128] sm:$0xff]
    %v98 = vld [vmem:[%s1 + $0x130] sm:$0xff]
    %v99 = vld [vmem:[%s1 + $0x138] sm:$0xff]
    %v100 = vld [vmem:[%s1 + $0x140] sm:$0xf]
    %v101 = vld [vmem:[%s1 + $0x148] sm:$0xf]
    %v103 = vcombine.high %v59, %v59
    %vm104 = vcmask 293888
    %v105 = vsel %vm104, %v103, 0
    %vm107 = vcmask 1043456
    %v109 = vsel %vm107, %v100, 0
    %v112 = vsel %vm107, %v101, 0
    %114 = vmatprep.subr.mxu0 %v61
    %115 = vmatpush1.msra.mxu0 %v60
    %116 = vmatprep.subr.mxu0 %v63
    %117 = vmatpush1.msra.mxu0 %v62
    %118 = vmatprep.subr.mxu0 %v65
    %119 = vmatpush1.msra.mxu0 %v64
    %120 = vmatprep.subr.mxu0 %v67
    %121 = vmatpush1.msra.mxu0 %v66
    %122 = vmatprep.subr.mxu0 %v69
    %123 = vmatpush1.msra.mxu0 %v68
    %124 = vmatprep.subr.mxu0 %v71
    %125 = vmatpush1.msra.mxu0 %v70
    %126 = vmatprep.subr.mxu0 %v73
    %127 = vmatpush1.msra.mxu0 %v72
    %128 = vmatprep.subr.mxu0 %v75
    %129 = vmatpush1.msra.mxu0 %v74
    %130 = vmatprep.subr.mxu0 %v77
    %131 = vmatpush1.msra.mxu0 %v76
    %132 = vmatprep.subr.mxu0 %v79
    %133 = vmatpush1.msra.mxu0 %v78
    %134 = vmatprep.subr.mxu0 %v81
    %135 = vmatpush1.msra.mxu0 %v80
    %136 = vmatprep.subr.mxu0 %v83
    %137 = vmatpush1.msra.mxu0 %v82
    %138 = vmatprep.subr.mxu0 %v85
    %139 = vmatpush1.msra.mxu0 %v84
    %140 = vmatprep.subr.mxu0 %v87
    %141 = vmatpush1.msra.mxu0 %v86
    %142 = vmatprep.subr.mxu0 %v89
    %143 = vmatpush1.msra.mxu0 %v88
    %144 = vmatprep.subr.mxu0 %v91
    %145 = vmatpush1.msra.mxu0 %v90
    %146 = vmatprep.subr.mxu0 %v93
    %147 = vmatpush1.msra.mxu0 %v92
    %148 = vmatprep.subr.mxu0 %v95
    %149 = vmatpush1.msra.mxu0 %v94
    %150 = vmatprep.subr.mxu0 %v97
    %151 = vmatpush1.msra.mxu0 %v96
    %152 = vmatprep.subr.mxu0 %v99
    %153 = vmatpush1.msra.mxu0 %v98
    %154 = vmatprep.subr.mxu0 %v112
    %155 = vmatpush1.msra.mxu0 %v109
    %156 = vmatprep.subr.mxu0 0.0
    %157 = vmatpush1.msra.mxu0 0.0
    %158 = vmatprep.subr.mxu0 0.0
    %159 = vmatpush1.msra.mxu0 0.0
    %160 = vmatprep.subr.mxu0 0.0
    %161 = vmatpush1.msra.mxu0 0.0
    %162 = vmatprep.subr.mxu0 0.0
    %163 = vmatpush1.msra.mxu0 0.0
    %164 = vmatprep.subr.mxu0 0.0
    %165 = vmatpush1.msra.mxu0 0.0
    %166 = vmatprep.subr.mxu0 0.0
    %167 = vmatpush1.msra.mxu0 0.0
    %168 = vmatprep.subr.mxu0 0.0
    %169 = vmatpush1.msra.mxu0 0.0
    %170 = vmatprep.subr.mxu0 0.0
    %171 = vmatpush1.msra.mxu0 0.0
    %172 = vmatprep.subr.mxu0 0.0
    %173 = vmatpush1.msra.mxu0 0.0
    %174 = vmatprep.subr.mxu0 0.0
    %175 = vmatpush1.msra.mxu0 0.0
    %176 = vmatprep.subr.mxu0 0.0
    %177 = vmatpush1.msra.mxu0 0.0
    %178 = vmatprep.mubr.f32.mxu0 %v105
    %179 = vmatmul.mubr.f32.gmra.mrb[0].mxu0 %v59
    %v180 = vpop.f32.mrb[0].mxu0
    %v181 = vadd.f32 0.0, %v180
    %v182 = vpop.f32.mrb[0].mxu0
    %v183 = vadd.f32 0.0, %v182
    %184 = vdwg.mxu0
    %vm185 = vcmask 130048
    %186 = vst.msk [vmem:[#allocation2] sm:$0xff] %vm185, 0.0
    %187 = vst.msk [vmem:[#allocation2 + $0x8] sm:$0xff] %vm185, 0.0
    %188 = vst.msk [vmem:[#allocation2 + $0x10] sm:$0xff] %vm185, 0.0
    %189 = vst.msk [vmem:[#allocation2 + $0x18] sm:$0xff] %vm185, 0.0
    %190 = vst.msk [vmem:[#allocation2 + $0x20] sm:$0xff] %vm185, 0.0
    %191 = vst.msk [vmem:[#allocation2 + $0x28] sm:$0xff] %vm185, 0.0
    %192 = vst.msk [vmem:[#allocation2 + $0x30] sm:$0xff] %vm185, 0.0
    %193 = vst.msk [vmem:[#allocation2 + $0x38] sm:$0xff] %vm185, 0.0
    %194 = vst.msk [vmem:[#allocation2 + $0x40] sm:$0xff] %vm185, 0.0
    %195 = vst.msk [vmem:[#allocation2 + $0x48] sm:$0xff] %vm185, 0.0
    %vm196 = vcmask 124928
    %197 = vst.msk [vmem:[#allocation2] sm:$0x7] %vm196, %v181
    %199 = vrot.lane.b32.xlu0 %v181, 112
    %v200 = vpop.permute.xlu0 %199
    %202 = vst.msk [vmem:[#allocation2 + $0x8] sm:$0x7] %vm196, %v200
    %203 = vrot.lane.b32.xlu0 %v181, 96
    %v204 = vpop.permute.xlu0 %203
    %206 = vst.msk [vmem:[#allocation2 + $0x10] sm:$0x7] %vm196, %v204
    %207 = vrot.lane.b32.xlu0 %v181, 80
    %v208 = vpop.permute.xlu0 %207
    %210 = vst.msk [vmem:[#allocation2 + $0x18] sm:$0x7] %vm196, %v208
    %211 = vrot.lane.b32.xlu0 %v181, 64
    %v212 = vpop.permute.xlu0 %211
    %214 = vst.msk [vmem:[#allocation2 + $0x20] sm:$0x7] %vm196, %v212
    %215 = vrot.lane.b32.xlu0 %v181, 48
    %v216 = vpop.permute.xlu0 %215
    %218 = vst.msk [vmem:[#allocation2 + $0x28] sm:$0x7] %vm196, %v216
    %219 = vrot.lane.b32.xlu0 %v181, 32
    %v220 = vpop.permute.xlu0 %219
    %222 = vst.msk [vmem:[#allocation2 + $0x30] sm:$0x7] %vm196, %v220
    %223 = vrot.lane.b32.xlu0 %v181, 16
    %v224 = vpop.permute.xlu0 %223
    %226 = vst.msk [vmem:[#allocation2 + $0x38] sm:$0x7] %vm196, %v224
    %227 = vst.msk [vmem:[#allocation2 + $0x40] sm:$0x7] %vm196, %v183
    %229 = vrot.lane.b32.xlu0 %v183, 112
    %v230 = vpop.permute.xlu0 %229
    %232 = vst.msk [vmem:[#allocation2 + $0x48] sm:$0x7] %vm196, %v230
    %v233 = vld [vmem:[%s2] sm:$0xff]
    %v234 = vld [vmem:[%s2 + $0x8] sm:$0xff]
    %v235 = vld [vmem:[%s2 + $0x10] sm:$0xff]
    %v236 = vld [vmem:[%s2 + $0x18] sm:$0xff]
    %v237 = vld [vmem:[%s2 + $0x20] sm:$0xff]
    %v238 = vld [vmem:[%s2 + $0x28] sm:$0xff]
    %v239 = vld [vmem:[%s2 + $0x30] sm:$0xff]
    %v240 = vld [vmem:[%s2 + $0x38] sm:$0xff]
    %v241 = vld [vmem:[%s2 + $0x40] sm:$0xff]
    %v242 = vld [vmem:[%s2 + $0x48] sm:$0xff]
    %v243 = vld [vmem:[#allocation2] sm:$0xff]
    %v244 = vld [vmem:[#allocation2 + $0x8] sm:$0xff]
    %v245 = vld [vmem:[#allocation2 + $0x10] sm:$0xff]
    %v246 = vld [vmem:[#allocation2 + $0x18] sm:$0xff]
    %v247 = vld [vmem:[#allocation2 + $0x20] sm:$0xff]
    %v248 = vld [vmem:[#allocation2 + $0x28] sm:$0xff]
    %v249 = vld [vmem:[#allocation2 + $0x30] sm:$0xff]
    %v250 = vld [vmem:[#allocation2 + $0x38] sm:$0xff]
    %v251 = vld [vmem:[#allocation2 + $0x40] sm:$0xff]
    %v252 = vld [vmem:[#allocation2 + $0x48] sm:$0xff]
    %254 = vset.pattern.permute.xlu0 0
    %255 = vperm.xlu0 %254, %v238
    %v256 = vpop.permute.xlu0 %255
    %259 = vset.pattern.permute.xlu0 0
    %260 = vperm.xlu0 %259, %v239
    %v261 = vpop.permute.xlu0 %260
    %264 = vset.pattern.permute.xlu0 0
    %265 = vperm.xlu0 %264, %v240
    %v266 = vpop.permute.xlu0 %265
    %269 = vset.pattern.permute.xlu0 0
    %270 = vperm.xlu0 %269, %v241
    %v271 = vpop.permute.xlu0 %270
    %274 = vset.pattern.permute.xlu0 0
    %275 = vperm.xlu0 %274, %v242
    %v276 = vpop.permute.xlu0 %275
    %vm278 = vcmask 654336
    %v280 = vsel %vm278, %v233, 0
    %v283 = vsel %vm278, %v234, 0
    %v286 = vsel %vm278, %v235, 0
    %v289 = vsel %vm278, %v236, 0
    %v292 = vsel %vm278, %v237, 0
    %294 = vmatprep.subr.mxu0 0.0
    %295 = vmatpush1.msra.mxu0 %v243
    %296 = vmatprep.subr.mxu0 0.0
    %297 = vmatpush1.msra.mxu0 %v244
    %298 = vmatprep.subr.mxu0 0.0
    %299 = vmatpush1.msra.mxu0 %v245
    %300 = vmatprep.subr.mxu0 0.0
    %301 = vmatpush1.msra.mxu0 %v246
    %302 = vmatprep.subr.mxu0 0.0
    %303 = vmatpush1.msra.mxu0 %v247
    %304 = vmatprep.subr.mxu0 0.0
    %305 = vmatpush1.msra.mxu0 %v248
    %306 = vmatprep.subr.mxu0 0.0
    %307 = vmatpush1.msra.mxu0 %v249
    %308 = vmatprep.subr.mxu0 0.0
    %309 = vmatpush1.msra.mxu0 %v250
    %310 = vmatprep.subr.mxu0 0.0
    %311 = vmatpush1.msra.mxu0 %v251
    %312 = vmatprep.subr.mxu0 0.0
    %313 = vmatpush1.msra.mxu0 %v252
    %314 = vmatprep.subr.mxu0 0.0
    %315 = vmatpush1.msra.mxu0 0.0
    %316 = vmatprep.subr.mxu0 0.0
    %317 = vmatpush1.msra.mxu0 0.0
    %318 = vmatprep.subr.mxu0 0.0
    %319 = vmatpush1.msra.mxu0 0.0
    %320 = vmatprep.subr.mxu0 0.0
    %321 = vmatpush1.msra.mxu0 0.0
    %322 = vmatprep.subr.mxu0 0.0
    %323 = vmatpush1.msra.mxu0 0.0
    %324 = vmatprep.subr.mxu0 0.0
    %325 = vmatpush1.msra.mxu0 0.0
    %326 = vmatprep.subr.mxu0 0.0
    %327 = vmatpush1.msra.mxu0 0.0
    %328 = vmatprep.subr.mxu0 0.0
    %329 = vmatpush1.msra.mxu0 0.0
    %330 = vmatprep.subr.mxu0 0.0
    %331 = vmatpush1.msra.mxu0 0.0
    %332 = vmatprep.subr.mxu0 0.0
    %333 = vmatpush1.msra.mxu0 0.0
    %334 = vmatprep.subr.mxu0 0.0
    %335 = vmatpush1.msra.mxu0 0.0
    %336 = vmatprep.subr.mxu0 0.0
    %337 = vmatpush1.msra.mxu0 0.0
    %338 = vmatprep.subr.mxu0 0.0
    %339 = vmatpush1.msra.mxu0 0.0
    %340 = vmatprep.subr.mxu0 0.0
    %341 = vmatpush1.msra.mxu0 0.0
    %342 = vmatprep.subr.mxu0 0.0
    %343 = vmatpush1.msra.mxu0 0.0
    %344 = vmatprep.subr.mxu0 0.0
    %345 = vmatpush1.msra.mxu0 0.0
    %346 = vmatprep.subr.mxu0 0.0
    %347 = vmatpush1.msra.mxu0 0.0
    %348 = vmatprep.subr.mxu0 0.0
    %349 = vmatpush1.msra.mxu0 0.0
    %350 = vmatprep.subr.mxu0 0.0
    %351 = vmatpush1.msra.mxu0 0.0
    %352 = vmatprep.subr.mxu0 0.0
    %353 = vmatpush1.msra.mxu0 0.0
    %354 = vmatprep.subr.mxu0 0.0
    %355 = vmatpush1.msra.mxu0 0.0
    %356 = vmatprep.subr.mxu0 0.0
    %357 = vmatpush1.msra.mxu0 0.0
    %358 = vmatprep.mubr.f32.mxu0 0.0
    %359 = vmatmul.mubr.f32.gmra.mrb[0].mxu0 %v280
    %v360 = vpop.f32.mrb[0].mxu0
    %v361 = vadd.f32 %v256, %v360
    %v362 = vpop.f32.mrb[0].mxu0
    %363 = vmatprep.mubr.f32.mxu0 0.0
    %364 = vmatmul.mubr.f32.gmra.mrb[0].mxu0 %v283
    %v365 = vpop.f32.mrb[0].mxu0
    %v366 = vadd.f32 %v261, %v365
    %v367 = vpop.f32.mrb[0].mxu0
    %368 = vmatprep.mubr.f32.mxu0 0.0
    %369 = vmatmul.mubr.f32.gmra.mrb[0].mxu0 %v286
    %v370 = vpop.f32.mrb[0].mxu0
    %v371 = vadd.f32 %v266, %v370
    %v372 = vpop.f32.mrb[0].mxu0
    %373 = vmatprep.mubr.f32.mxu0 0.0
    %374 = vmatmul.mubr.f32.gmra.mrb[0].mxu0 %v289
    %v375 = vpop.f32.mrb[0].mxu0
    %v376 = vadd.f32 %v271, %v375
    %v377 = vpop.f32.mrb[0].mxu0
    %378 = vmatprep.mubr.f32.mxu0 0.0
    %379 = vmatmul.mubr.f32.gmra.mrb[0].mxu0 %v292
    %v380 = vpop.f32.mrb[0].mxu0
    %v381 = vadd.f32 %v276, %v380
    %v382 = vpop.f32.mrb[0].mxu0
    %383 = vdwg.mxu0
    %v384 = vsel %vm185, %v361, -inf
    %v385 = vrot.slane %v384, 4
    %v386 = vmax.f32 %v384, %v385
    %v387 = vrot.slane %v386, 2
    %v388 = vmax.f32 %v386, %v387
    %v389 = vrot.slane %v388, 1
    %v390 = vmax.f32 %v388, %v389
    %v391 = vsel %vm185, %v366, -inf
    %v392 = vrot.slane %v391, 4
    %v393 = vmax.f32 %v391, %v392
    %v394 = vrot.slane %v393, 2
    %v395 = vmax.f32 %v393, %v394
    %v396 = vrot.slane %v395, 1
    %v397 = vmax.f32 %v395, %v396
    %v398 = vsel %vm185, %v371, -inf
    %v399 = vrot.slane %v398, 4
    %v400 = vmax.f32 %v398, %v399
    %v401 = vrot.slane %v400, 2
    %v402 = vmax.f32 %v400, %v401
    %v403 = vrot.slane %v402, 1
    %v404 = vmax.f32 %v402, %v403
    %v405 = vsel %vm185, %v376, -inf
    %v406 = vrot.slane %v405, 4
    %v407 = vmax.f32 %v405, %v406
    %v408 = vrot.slane %v407, 2
    %v409 = vmax.f32 %v407, %v408
    %v410 = vrot.slane %v409, 1
    %v411 = vmax.f32 %v409, %v410
    %v412 = vsel %vm185, %v381, -inf
    %v413 = vrot.slane %v412, 4
    %v414 = vmax.f32 %v412, %v413
    %v415 = vrot.slane %v414, 2
    %v416 = vmax.f32 %v414, %v415
    %v417 = vrot.slane %v416, 1
    %v418 = vmax.f32 %v416, %v417
    %v419 = vld [vmem:[%s2 + $0x50] sm:$0x1f]
    %vm425 = vcmask 1041409
    %v426 = vsel %vm425, %v397, %v390
    %vm427 = vcmask 1042434
    %v428 = vsel %vm427, %v404, %v426
    %vm429 = vcmask 1043459
    %v430 = vsel %vm429, %v411, %v428
    %vm431 = vcmask 1044484
    %v432 = vsel %vm431, %v418, %v430
    %434 = vrot.lane.b32.xlu0 %v432, 16
    %v435 = vpop.permute.xlu0 %434
    %437 = vrot.lane.b32.xlu0 %v432, 32
    %v438 = vpop.permute.xlu0 %437
    %v440 = vsel %vm185, %v432, %v435
    %vm441 = vcmask 261120
    %v442 = vsel %vm441, %v440, %v438
    %v443 = vmul.f32 %v442, %v419
    %vm444 = vcmask 389120
    %v445 = vsel %vm444, %v443, 0.0
    %v446 = vrot.slane %v445, 4
    %v447 = vadd.f32 %v445, %v446
    %v448 = vrot.slane %v447, 2
    %v449 = vadd.f32 %v447, %v448
    %v450 = vrot.slane %v449, 1
    %v451 = vadd.f32 %v449, %v450
    %v452 = vld [vmem:[%s2 + $0x58] sm:$0xff]
    %v453 = vld [vmem:[%s2 + $0x60] sm:$0xff]
    %v454 = vld [vmem:[%s2 + $0x68] sm:$0xff]
    %v455 = vld [vmem:[%s2 + $0x70] sm:$0xff]
    %v456 = vld [vmem:[%s2 + $0x78] sm:$0xff]
    %v457 = vld [vmem:[%s2 + $0x80] sm:$0xff]
    %v458 = vld [vmem:[%s2 + $0x88] sm:$0x1]
    %vm459 = vcmask 392192
    %v461 = vsel %vm459, %v451, 0
    %463 = vmatprep.subr.mxu0 0.0
    %464 = vmatpush1.msra.mxu0 %v452
    %465 = vmatprep.subr.mxu0 0.0
    %466 = vmatpush1.msra.mxu0 %v453
    %467 = vmatprep.subr.mxu0 0.0
    %468 = vmatpush1.msra.mxu0 %v454
    %469 = vmatprep.subr.mxu0 0.0
    %470 = vmatpush1.msra.mxu0 %v455
    %471 = vmatprep.subr.mxu0 0.0
    %472 = vmatpush1.msra.mxu0 %v456
    %473 = vmatprep.subr.mxu0 0.0
    %474 = vmatpush1.msra.mxu0 %v457
    %475 = vmatprep.subr.mxu0 0.0
    %476 = vmatpush1.msra.mxu0 0.0
    %477 = vmatprep.subr.mxu0 0.0
    %478 = vmatpush1.msra.mxu0 0.0
    %479 = vmatprep.subr.mxu0 0.0
    %480 = vmatpush1.msra.mxu0 0.0
    %481 = vmatprep.subr.mxu0 0.0
    %482 = vmatpush1.msra.mxu0 0.0
    %483 = vmatprep.subr.mxu0 0.0
    %484 = vmatpush1.msra.mxu0 0.0
    %485 = vmatprep.subr.mxu0 0.0
    %486 = vmatpush1.msra.mxu0 0.0
    %487 = vmatprep.subr.mxu0 0.0
    %488 = vmatpush1.msra.mxu0 0.0
    %489 = vmatprep.subr.mxu0 0.0
    %490 = vmatpush1.msra.mxu0 0.0
    %491 = vmatprep.subr.mxu0 0.0
    %492 = vmatpush1.msra.mxu0 0.0
    %493 = vmatprep.subr.mxu0 0.0
    %494 = vmatpush1.msra.mxu0 0.0
    %495 = vmatprep.subr.mxu0 0.0
    %496 = vmatpush1.msra.mxu0 0.0
    %497 = vmatprep.subr.mxu0 0.0
    %498 = vmatpush1.msra.mxu0 0.0
    %499 = vmatprep.subr.mxu0 0.0
    %500 = vmatpush1.msra.mxu0 0.0
    %501 = vmatprep.subr.mxu0 0.0
    %502 = vmatpush1.msra.mxu0 0.0
    %503 = vmatprep.subr.mxu0 0.0
    %504 = vmatpush1.msra.mxu0 0.0
    %505 = vmatprep.subr.mxu0 0.0
    %506 = vmatpush1.msra.mxu0 0.0
    %507 = vmatprep.subr.mxu0 0.0
    %508 = vmatpush1.msra.mxu0 0.0
    %509 = vmatprep.subr.mxu0 0.0
    %510 = vmatpush1.msra.mxu0 0.0
    %511 = vmatprep.subr.mxu0 0.0
    %512 = vmatpush1.msra.mxu0 0.0
    %513 = vmatprep.subr.mxu0 0.0
    %514 = vmatpush1.msra.mxu0 0.0
    %515 = vmatprep.subr.mxu0 0.0
    %516 = vmatpush1.msra.mxu0 0.0
    %517 = vmatprep.subr.mxu0 0.0
    %518 = vmatpush1.msra.mxu0 0.0
    %519 = vmatprep.subr.mxu0 0.0
    %520 = vmatpush1.msra.mxu0 0.0
    %521 = vmatprep.subr.mxu0 0.0
    %522 = vmatpush1.msra.mxu0 0.0
    %523 = vmatprep.subr.mxu0 0.0
    %524 = vmatpush1.msra.mxu0 0.0
    %525 = vmatprep.subr.mxu0 0.0
    %526 = vmatpush1.msra.mxu0 0.0
    %527 = vmatprep.mubr.f32.mxu0 0.0
    %528 = vmatmul.mubr.f32.gmra.mrb[0].mxu0 %v461
    %v529 = vpop.f32.mrb[0].mxu0
    %v530 = vadd.f32 %v458, %v529
    %v531 = vpop.f32.mrb[0].mxu0
    %532 = vdwg.mxu0
    %533 = vst [vmem:[#allocation3] sm:$0x1] %v530
    // Predicated region
    $region14: #{tpu_custom_call.1} parent=1 // pred_check
      _
    $region15: #{tpu_custom_call.1} parent=1 // pred_check_branch
      %535 = sbr.rel (0) target = $region17
    $region16: #{tpu_custom_call.1} parent=1 // pred_region
      %s537 = ssub.s32 16, 16
      %538 = vsyncadd [#allocation4], %s537
      %s540 = sshll.u32 [#allocation3], 4
      %s541 = int_to_ptr.vmem [resolvable:$true] %s540
      %543 = dma.vmem_to_hbm [thread:$0]  %s541, 16, %s3, [#allocation4]
    $region17: #{tpu_custom_call.1} parent=1 // pred_fallthru
      _
    // Predicated region
    $region18: #{tpu_custom_call.1} parent=1 // pred_check
      _
    $region19: #{tpu_custom_call.1} parent=1 // pred_check_branch
      %545 = sbr.rel (0) target = $region21
    $region20: #{tpu_custom_call.1} parent=1 // pred_region
      %546 = dma.done [#allocation4], 16
    $region21: #{tpu_custom_call.1} parent=1 // pred_fallthru
      _
    %547 = vsyncpa [#allocation4], 1

</llo_original>
